<compile_context>
chip_gen: v5e
topology: v5e:2x2
jax: 0.10.0
libtpu: 0.0.40
codegen_flags: <defaults>
</compile_context>

<pallas_src>
import numpy as np
import jax
import jax.numpy as jnp
from jax.experimental import pallas as pl
from jax.experimental.pallas import tpu as pltpu


# ---------------------------------------------------------------------------
# Model config.
# TODO(synk): cardinalities come from weights/cat_maps.joblib in the real
# backend; deterministic synthetic values are used here (no file reads).
# ---------------------------------------------------------------------------
def _emb_dim(card: int) -> int:
    return min(50, (card + 1) // 2)


CAT_CARDS = [2, 2, 6, 13, 2, 5, 3, 4]              # synthetic categorical cardinalities
EMB_DIMS = [(c, _emb_dim(c)) for c in CAT_CARDS]
NUM_COLS = ["BMI", "PhysicalHealth", "MentalHealth", "SleepTime"]
N_CAT = len(CAT_CARDS)
N_CONT = len(NUM_COLS)
EMB_TOTAL_DIM = sum(d for _, d in EMB_DIMS)        # 20
IN_FEATS = EMB_TOTAL_DIM + N_CONT                  # 24
TOTAL_CARDS = sum(CAT_CARDS)                       # 37
H1, H2, H_OUT = 128, 64, 1


def _round_up(x: int, m: int) -> int:
    return (x + m - 1) // m * m


N_OH = _round_up(TOTAL_CARDS, 8)                   # 40 one-hot rows (padded)
K1 = _round_up(N_OH + N_CONT + 1, 8)               # 48 = one-hot | cont | bias | pad


# ---------------------------------------------------------------------------
# Fused kernel, batch-on-lanes layout:
#   cats : (8,  TB) int8      cont1 : (5, TB) bf16 (4 features + ones row)
#   x    : (48, TB) bf16      h1 : (128, TB)      h2 : (64, TB)     o : (1, TB)
# ---------------------------------------------------------------------------
def _fused_kernel(cats_ref, cont_ref, rowadj_ref, sel_ref, pc1_ref,
                  w1m_ref, w2_ref, b2_ref, w3_ref, b3_ref, o_ref):
    # --- build the merged (K1, TB) first-layer activation --------------------
    # selected[r, b] = raw id of the categorical column that owns one-hot row r
    # (tiny bf16 matmul -> rides the MXU push slot; exact for small integers).
    cats_bf = cats_ref[...].astype(jnp.bfloat16)                      # (8, TB)
    selected = jnp.dot(sel_ref[...], cats_bf,
                       preferred_element_type=jnp.float32)            # (K1, TB)
    # ONE compare builds the whole one-hot slab (rows >= 37 can never match).
    oh = (rowadj_ref[...] == selected).astype(jnp.float32)            # (K1, TB)
    # cont features + bias-ones row placed at rows [N_OH, N_OH+5) (tiny matmul).
    placed = jnp.dot(pc1_ref[...], cont_ref[...],
                     preferred_element_type=jnp.float32)               # (K1, TB)
    x = (oh + placed).astype(jnp.bfloat16)          # disjoint supports -> exact

    # --- layer 1 (bias folded into w1m via the ones row) ---------------------
    h1 = jnp.dot(w1m_ref[...], x, preferred_element_type=jnp.float32)  # (128, TB)
    h1 = jnp.maximum(h1, 0.0).astype(jnp.bfloat16)

    # --- layer 2 --------------------------------------------------------------
    h2 = jnp.dot(w2_ref[...], h1, preferred_element_type=jnp.float32)  # (64, TB)
    h2 = jnp.maximum(h2 + b2_ref[...], 0.0)

    # --- layer 3 (64 -> 1): VPU multiply + sublane (XLU) reduce ---------------
    o_ref[...] = jnp.sum(h2 * w3_ref[...], axis=0, keepdims=True) + b3_ref[...]


def mlp_fused_pallas(cats_p, cont_p, f, tb):
    n_cat, b_pad = cats_p.shape
    assert b_pad % tb == 0 and tb % 128 == 0
    grid = (b_pad // tb,)

    def batch_spec(rows):
        return pl.BlockSpec((rows, tb), lambda i: (0, i))

    def resident_spec(arr):
        # Constant block index -> fetched once, VMEM-resident across the grid.
        return pl.BlockSpec(arr.shape, lambda i: (0, 0))

    return pl.pallas_call(
        _fused_kernel,
        out_shape=jax.ShapeDtypeStruct((1, b_pad), jnp.float32),
        grid=grid,
        in_specs=[
            batch_spec(n_cat),                 # cats  (8, TB)  int8
            batch_spec(cont_p.shape[0]),       # cont1 (5, TB)  bf16
            resident_spec(f["rowadj"]),        # (K1, 1)  f32
            resident_spec(f["sel"]),           # (K1, 8)  bf16
            resident_spec(f["pc1"]),           # (K1, 5)  bf16
            resident_spec(f["w1m"]),           # (128, K1) bf16
            resident_spec(f["w2"]),            # (64, 128) bf16
            resident_spec(f["b2"]),            # (64, 1)  f32
            resident_spec(f["w3"]),            # (64, 1)  f32
            resident_spec(f["b3"]),            # (1, 1)   f32
        ],
        out_specs=batch_spec(1),               # lane-dense (1, TB) output block
        compiler_params=pltpu.CompilerParams(
            dimension_semantics=("parallel",)  # megacore batch split on v7x
        ),
    )(cats_p, cont_p, f["rowadj"], f["sel"], f["pc1"],
      f["w1m"], f["w2"], f["b2"], f["w3"], f["b3"])


# ---------------------------------------------------------------------------
# One-time parameter folding (do offline / at model-load time, not per call).
# ---------------------------------------------------------------------------
def fold_params(params):
    w1 = params["w1"]                                      # (IN_FEATS, H1), f32
    blocks, dim_off = [], 0
    for tbl in params["emb_tables"]:
        d = tbl.shape[1]
        blocks.append(tbl @ w1[dim_off:dim_off + d, :])    # (card_j, H1), f32 fold
        dim_off += d
    w1_cat = jnp.concatenate(blocks, axis=0)               # (TOTAL_CARDS, H1)

    w1m = jnp.zeros((K1, H1), jnp.float32)
    w1m = w1m.at[:TOTAL_CARDS].set(w1_cat)                 # one-hot rows
    w1m = w1m.at[N_OH:N_OH + N_CONT].set(w1[dim_off:, :])  # cont rows
    w1m = w1m.at[N_OH + N_CONT].set(params["b1"].reshape(H1))  # bias row

    # sel[r, j] = 1 iff categorical column j owns one-hot row r.
    # rowadj[r]  = local id that row r encodes (-1 for non-one-hot rows).
    # pc1[r, j]  = 1 places [cont; ones] row j at activation row N_OH + j.
    sel = np.zeros((K1, N_CAT), np.float32)
    rowadj = np.full((K1, 1), -1.0, np.float32)
    pc1 = np.zeros((K1, N_CONT + 1), np.float32)
    off = 0
    for j, card in enumerate(CAT_CARDS):
        for r in range(off, off + card):
            sel[r, j] = 1.0
            rowadj[r, 0] = float(r - off)
        off += card
    for j in range(N_CONT + 1):
        pc1[N_OH + j, j] = 1.0

    return {
        "sel": jnp.asarray(sel, jnp.bfloat16),
        "rowadj": jnp.asarray(rowadj, jnp.float32),
        "pc1": jnp.asarray(pc1, jnp.bfloat16),
        "w1m": w1m.T.astype(jnp.bfloat16),                  # (H1, K1)
        "w2": params["w2"].T.astype(jnp.bfloat16),          # (H2, H1)
        "b2": params["b2"].reshape(H2, 1).astype(jnp.float32),
        "w3": params["w3"].reshape(H2, 1).astype(jnp.float32),
        "b3": params["b3"].reshape(1, 1).astype(jnp.float32),
    }


def prep_inputs(cats_list, cont):
    """Ingest-time marshaling (once per batch, outside the hot path):
    int8 batch-on-lanes category ids + bf16 transposed cont with a ones row."""
    cats_i8 = jnp.stack([c.astype(jnp.int8) for c in cats_list], axis=0)   # (8, B)
    B = cont.shape[0]
    cont1 = jnp.concatenate(
        [cont.astype(jnp.float32).T, jnp.ones((1, B), jnp.float32)], axis=0
    ).astype(jnp.bfloat16)                                                  # (5, B)
    return cats_i8, cont1


def tabular_net_forward(folded, cats_i8, cont1, tb=2048):
    """cats_i8: (8, B) int8; cont1: (5, B) bf16 -> (B,) float32."""
    B = cats_i8.shape[1]
    b_ceil = _round_up(B, 128)
    cap = max(128, (b_ceil // 2) // 128 * 128)   # keep grid >= 2 when possible (v7x)
    tb = max(128, min(tb, cap))
    b_pad = _round_up(B, tb)
    cats_p = jnp.pad(cats_i8, ((0, 0), (0, b_pad - B)))   # pad ids = 0 (valid, discarded)
    cont_p = jnp.pad(cont1, ((0, 0), (0, b_pad - B)))
    out = mlp_fused_pallas(cats_p, cont_p, folded, tb)
    return out[0, :B]                                     # matches torch .squeeze(1)


# ---------------------------------------------------------------------------
# Init + pure-JAX reference (original gather -> concat -> MLP semantics, f32)
# ---------------------------------------------------------------------------
def init_params(key):
    keys = jax.random.split(key, len(EMB_DIMS) + 6)
    emb_tables = [
        jax.random.normal(keys[i], (card, dim), jnp.float32) * 0.1
        for i, (card, dim) in enumerate(EMB_DIMS)
    ]
    k = len(EMB_DIMS)
    w1 = jax.random.normal(keys[k + 0], (IN_FEATS, H1), jnp.float32) * 0.05
    b1 = jax.random.normal(keys[k + 1], (1, H1), jnp.float32) * 0.01
    w2 = jax.random.normal(keys[k + 2], (H1, H2), jnp.float32) * 0.05
    b2 = jax.random.normal(keys[k + 3], (1, H2), jnp.float32) * 0.01
    w3 = jax.random.normal(keys[k + 4], (H2, H_OUT), jnp.float32) * 0.05
    b3 = jax.random.normal(keys[k + 5], (1, H_OUT), jnp.float32) * 0.01
    return {"emb_tables": emb_tables, "w1": w1, "b1": b1,
            "w2": w2, "b2": b2, "w3": w3, "b3": b3}


def reference_forward(params, cats, cont):
    x_cat = [tbl[c] for tbl, c in zip(params["emb_tables"], cats)]
    x = jnp.concatenate(x_cat + [cont], axis=1).astype(jnp.float32)
    h1 = jnp.maximum(x @ params["w1"] + params["b1"], 0.0)
    h2 = jnp.maximum(h1 @ params["w2"] + params["b2"], 0.0)
    return (h2 @ params["w3"] + params["b3"])[:, 0]


if __name__ == "__main__":
    B = 200                                   # pads to 256 -> 2-step grid of TB=128
    key = jax.random.PRNGKey(0)
    kp, *kc = jax.random.split(key, len(CAT_CARDS) + 2)
    params = init_params(kp)

    cats = [
        jax.random.randint(kc[i], (B,), 0, card, dtype=jnp.int32)
        for i, card in enumerate(CAT_CARDS)
    ]
    cont = jax.random.normal(kc[-1], (B, len(NUM_COLS)), jnp.float32)

    folded = fold_params(params)              # once, at model-load time
    cats_i8, cont1 = prep_inputs(cats, cont)  # once per batch, at ingest time

    out = tabular_net_forward(folded, cats_i8, cont1, tb=2048)
    out = jax.block_until_ready(out)

    ref = reference_forward(params, cats, cont)
    assert out.shape == (B,), out.shape
    # bf16 matmul operands (f32 accumulation) -> loosened tolerance vs f32 reference
    max_err = float(jnp.max(jnp.abs(out - ref)))
    assert jnp.allclose(out, ref, atol=2e-2, rtol=2e-2), max_err
    print("KERNEL_OK")
</pallas_src>

<mosaic_0001>
module attributes {stable_mosaic.version = 11 : i64} {
  func.func @_fused_kernel(%arg0: i32, %arg1: memref<8x128xi8, #tpu.memory_space<vmem>>, %arg2: memref<5x128xbf16, #tpu.memory_space<vmem>>, %arg3: memref<48x1xf32, #tpu.memory_space<vmem>>, %arg4: memref<48x8xbf16, #tpu.memory_space<vmem>>, %arg5: memref<48x5xbf16, #tpu.memory_space<vmem>>, %arg6: memref<128x48xbf16, #tpu.memory_space<vmem>>, %arg7: memref<64x128xbf16, #tpu.memory_space<vmem>>, %arg8: memref<64x1xf32, #tpu.memory_space<vmem>>, %arg9: memref<64x1xf32, #tpu.memory_space<vmem>>, %arg10: memref<1x1xf32, #tpu.memory_space<vmem>>, %arg11: memref<1x128xf32, #tpu.memory_space<vmem>>) attributes {dimension_semantics = [#tpu.dimension_semantics<parallel>], iteration_bounds = array<i64: 2>, scalar_prefetch = 0 : i64, scratch_operands = 0 : i64, tpu.core_type = #tpu.core_type<tc>, window_params = [{transform_indices = @transform_0, window_bounds = array<i64: 8, 128>}, {transform_indices = @transform_1, window_bounds = array<i64: 5, 128>}, {pipeline_mode = #tpu.pipeline_mode<synchronous>, transform_indices = @transform_2, window_bounds = array<i64: 48, 1>}, {pipeline_mode = #tpu.pipeline_mode<synchronous>, transform_indices = @transform_3, window_bounds = array<i64: 48, 8>}, {pipeline_mode = #tpu.pipeline_mode<synchronous>, transform_indices = @transform_4, window_bounds = array<i64: 48, 5>}, {pipeline_mode = #tpu.pipeline_mode<synchronous>, transform_indices = @transform_5, window_bounds = array<i64: 128, 48>}, {pipeline_mode = #tpu.pipeline_mode<synchronous>, transform_indices = @transform_6, window_bounds = array<i64: 64, 128>}, {pipeline_mode = #tpu.pipeline_mode<synchronous>, transform_indices = @transform_7, window_bounds = array<i64: 64, 1>}, {pipeline_mode = #tpu.pipeline_mode<synchronous>, transform_indices = @transform_8, window_bounds = array<i64: 64, 1>}, {pipeline_mode = #tpu.pipeline_mode<synchronous>, transform_indices = @transform_9, window_bounds = array<i64: 1, 1>}, {transform_indices = @transform_10, window_bounds = array<i64: 1, 128>}]} {
    %c0 = arith.constant 0 : index
    %c0_0 = arith.constant 0 : index
    %0 = vector.load %arg1[%c0, %c0_0] : memref<8x128xi8, #tpu.memory_space<vmem>>, vector<8x128xi8>
    %1 = arith.sitofp %0 : vector<8x128xi8> to vector<8x128xbf16>
    %c0_1 = arith.constant 0 : index
    %c0_2 = arith.constant 0 : index
    %2 = vector.load %arg4[%c0_1, %c0_2] : memref<48x8xbf16, #tpu.memory_space<vmem>>, vector<48x8xbf16>
    %cst = arith.constant dense<0.000000e+00> : vector<48x128xf32>
    %3 = tpu.matmul %2, %1, %cst {dimension_numbers = #tpu.dot_dimension_numbers<[1], [0], [0], [1], [0, 0, 1, 1], [], []>} : vector<48x8xbf16>, vector<8x128xbf16>, vector<48x128xf32> -> vector<48x128xf32>
    %c0_3 = arith.constant 0 : index
    %c0_4 = arith.constant 0 : index
    %4 = vector.load %arg3[%c0_3, %c0_4] : memref<48x1xf32, #tpu.memory_space<vmem>>, vector<48x1xf32>
    %5 = vector.broadcast %4 : vector<48x1xf32> to vector<48x128xf32>
    %6 = arith.cmpf oeq, %5, %3 : vector<48x128xf32>
    %7 = arith.extui %6 : vector<48x128xi1> to vector<48x128xi32>
    %8 = arith.sitofp %7 : vector<48x128xi32> to vector<48x128xf32>
    %c0_5 = arith.constant 0 : index
    %c0_6 = arith.constant 0 : index
    %9 = vector.load %arg5[%c0_5, %c0_6] : memref<48x5xbf16, #tpu.memory_space<vmem>>, vector<48x5xbf16>
    %c0_7 = arith.constant 0 : index
    %c0_8 = arith.constant 0 : index
    %10 = vector.load %arg2[%c0_7, %c0_8] : memref<5x128xbf16, #tpu.memory_space<vmem>>, vector<5x128xbf16>
    %cst_9 = arith.constant dense<0.000000e+00> : vector<48x128xf32>
    %11 = tpu.matmul %9, %10, %cst_9 {dimension_numbers = #tpu.dot_dimension_numbers<[1], [0], [0], [1], [0, 0, 1, 1], [], []>} : vector<48x5xbf16>, vector<5x128xbf16>, vector<48x128xf32> -> vector<48x128xf32>
    %12 = arith.addf %8, %11 : vector<48x128xf32>
    %13 = arith.truncf %12 : vector<48x128xf32> to vector<48x128xbf16>
    %c0_10 = arith.constant 0 : index
    %c0_11 = arith.constant 0 : index
    %14 = vector.load %arg6[%c0_10, %c0_11] : memref<128x48xbf16, #tpu.memory_space<vmem>>, vector<128x48xbf16>
    %cst_12 = arith.constant dense<0.000000e+00> : vector<128x128xf32>
    %15 = tpu.matmul %14, %13, %cst_12 {dimension_numbers = #tpu.dot_dimension_numbers<[1], [0], [0], [1], [0, 0, 1, 1], [], []>} : vector<128x48xbf16>, vector<48x128xbf16>, vector<128x128xf32> -> vector<128x128xf32>
    %cst_13 = arith.constant 0.000000e+00 : f32
    %16 = vector.broadcast %cst_13 : f32 to vector<128x128xf32>
    %17 = arith.maximumf %15, %16 : vector<128x128xf32>
    %18 = arith.truncf %17 : vector<128x128xf32> to vector<128x128xbf16>
    %c0_14 = arith.constant 0 : index
    %c0_15 = arith.constant 0 : index
    %19 = vector.load %arg7[%c0_14, %c0_15] : memref<64x128xbf16, #tpu.memory_space<vmem>>, vector<64x128xbf16>
    %cst_16 = arith.constant dense<0.000000e+00> : vector<64x128xf32>
    %20 = tpu.matmul %19, %18, %cst_16 {dimension_numbers = #tpu.dot_dimension_numbers<[1], [0], [0], [1], [0, 0, 1, 1], [], []>} : vector<64x128xbf16>, vector<128x128xbf16>, vector<64x128xf32> -> vector<64x128xf32>
    %c0_17 = arith.constant 0 : index
    %c0_18 = arith.constant 0 : index
    %21 = vector.load %arg8[%c0_17, %c0_18] : memref<64x1xf32, #tpu.memory_space<vmem>>, vector<64x1xf32>
    %22 = vector.broadcast %21 : vector<64x1xf32> to vector<64x128xf32>
    %23 = arith.addf %20, %22 : vector<64x128xf32>
    %cst_19 = arith.constant 0.000000e+00 : f32
    %24 = vector.broadcast %cst_19 : f32 to vector<64x128xf32>
    %25 = arith.maximumf %23, %24 : vector<64x128xf32>
    %c0_20 = arith.constant 0 : index
    %c0_21 = arith.constant 0 : index
    %26 = vector.load %arg9[%c0_20, %c0_21] : memref<64x1xf32, #tpu.memory_space<vmem>>, vector<64x1xf32>
    %27 = vector.broadcast %26 : vector<64x1xf32> to vector<64x128xf32>
    %28 = arith.mulf %25, %27 : vector<64x128xf32>
    %cst_22 = arith.constant dense<0.000000e+00> : vector<128xf32>
    %29 = vector.multi_reduction <add>, %28, %cst_22 [0] : vector<64x128xf32> to vector<128xf32>
    %30 = vector.shape_cast %29 : vector<128xf32> to vector<1x128xf32>
    %c0_23 = arith.constant 0 : index
    %c0_24 = arith.constant 0 : index
    %31 = vector.load %arg10[%c0_23, %c0_24] : memref<1x1xf32, #tpu.memory_space<vmem>>, vector<1x1xf32>
    %32 = vector.broadcast %31 : vector<1x1xf32> to vector<1x128xf32>
    %33 = arith.addf %30, %32 : vector<1x128xf32>
    %c0_25 = arith.constant 0 : index
    %c0_26 = arith.constant 0 : index
    %34 = vector.load %arg11[%c0_25, %c0_26] : memref<1x128xf32, #tpu.memory_space<vmem>>, vector<1x128xf32>
    tpu.vector_store %arg11[%c0_25, %c0_26], %33 {strides = array<i32>} : memref<1x128xf32, #tpu.memory_space<vmem>>, vector<1x128xf32>,
    return
  }
  func.func @transform_0(%arg0: i32) -> (i32, i32) {
    %c0_i32 = arith.constant 0 : i32
    %c0_i32_0 = arith.constant 0 : i32
    return %c0_i32, %arg0 : i32, i32
  }
  func.func @transform_1(%arg0: i32) -> (i32, i32) {
    %c0_i32 = arith.constant 0 : i32
    %c0_i32_0 = arith.constant 0 : i32
    return %c0_i32, %arg0 : i32, i32
  }
  func.func @transform_2(%arg0: i32) -> (i32, i32) {
    %c0_i32 = arith.constant 0 : i32
    %c0_i32_0 = arith.constant 0 : i32
    %c0_i32_1 = arith.constant 0 : i32
    return %c0_i32, %c0_i32_0 : i32, i32
  }
  func.func @transform_3(%arg0: i32) -> (i32, i32) {
    %c0_i32 = arith.constant 0 : i32
    %c0_i32_0 = arith.constant 0 : i32
    %c0_i32_1 = arith.constant 0 : i32
    return %c0_i32, %c0_i32_0 : i32, i32
  }
  func.func @transform_4(%arg0: i32) -> (i32, i32) {
    %c0_i32 = arith.constant 0 : i32
    %c0_i32_0 = arith.constant 0 : i32
    %c0_i32_1 = arith.constant 0 : i32
    return %c0_i32, %c0_i32_0 : i32, i32
  }
  func.func @transform_5(%arg0: i32) -> (i32, i32) {
    %c0_i32 = arith.constant 0 : i32
    %c0_i32_0 = arith.constant 0 : i32
    %c0_i32_1 = arith.constant 0 : i32
    return %c0_i32, %c0_i32_0 : i32, i32
  }
  func.func @transform_6(%arg0: i32) -> (i32, i32) {
    %c0_i32 = arith.constant 0 : i32
    %c0_i32_0 = arith.constant 0 : i32
    %c0_i32_1 = arith.constant 0 : i32
    return %c0_i32, %c0_i32_0 : i32, i32
  }
  func.func @transform_7(%arg0: i32) -> (i32, i32) {
    %c0_i32 = arith.constant 0 : i32
    %c0_i32_0 = arith.constant 0 : i32
    %c0_i32_1 = arith.constant 0 : i32
    return %c0_i32, %c0_i32_0 : i32, i32
  }
  func.func @transform_8(%arg0: i32) -> (i32, i32) {
    %c0_i32 = arith.constant 0 : i32
    %c0_i32_0 = arith.constant 0 : i32
    %c0_i32_1 = arith.constant 0 : i32
    return %c0_i32, %c0_i32_0 : i32, i32
  }
  func.func @transform_9(%arg0: i32) -> (i32, i32) {
    %c0_i32 = arith.constant 0 : i32
    %c0_i32_0 = arith.constant 0 : i32
    %c0_i32_1 = arith.constant 0 : i32
    return %c0_i32, %c0_i32_0 : i32, i32
  }
  func.func @transform_10(%arg0: i32) -> (i32, i32) {
    %c0_i32 = arith.constant 0 : i32
    %c0_i32_0 = arith.constant 0 : i32
    return %c0_i32, %arg0 : i32, i32
  }
}

</mosaic_0001>

<llo_original>
// kernel: tpu_custom_call.1
$region0: #{tpu_custom_call.1}
  #allocation0 [shape = 'u32[]', space=smem, size = 0x4, offset = 0x4, fixed_abs, tag = 'smem constant byte address 0x4 - core index']
  #allocation1 [shape = 'u32[72,128]{1,0:T(1,128)}', space=vmem, size = 0x9000, scoped, tag = 'internal scratch']
  #allocation2 [shape = 'f32[1,1]{1,0:T(1,128)S(1)}', space=vmem, size = 0x200, scoped, tag = 'scoped memory for tpu_custom_call.1']
  %s0 = inlined_call_operand.vmem [shape: s8[8,256], index: 0, kind: input, shape index: {}]
  %s1 = inlined_call_operand.vmem [shape: bf16[5,256], index: 1, kind: input, shape index: {}]
  %s2 = inlined_call_operand.vmem [shape: f32[48,1], index: 2, kind: input, shape index: {}]
  %s3 = inlined_call_operand.vmem [shape: bf16[48,8], index: 3, kind: input, shape index: {}]
  %s4 = inlined_call_operand.vmem [shape: bf16[48,5], index: 4, kind: input, shape index: {}]
  %s5 = inlined_call_operand.vmem [shape: bf16[128,48], index: 5, kind: input, shape index: {}]
  %s6 = inlined_call_operand.vmem [shape: bf16[64,128], index: 6, kind: input, shape index: {}]
  %s7 = inlined_call_operand.vmem [shape: f32[64,1], index: 7, kind: input, shape index: {}]
  %s8 = inlined_call_operand.vmem [shape: f32[64,1], index: 8, kind: input, shape index: {}]
  %s9 = inlined_call_operand.<no memory space> [shape: f32[1,1], index: 9, kind: input, shape index: {}]
  %s10 = inlined_call_operand.hbm [shape: f32[1,256], index: 10, kind: output, shape index: {}]
  %s11 = sld [smem:[#allocation0]]
  $region73: #{tpu_custom_call.1} parent=0
    _
  %s13 = ssub.s32 1, %s11
  %s14 = scalar_select 0, %s13, %s11
  %v15 = vstv %s9
  %16 = vst [vmem:[#allocation2] sm:$0x1] %v15
  $region1: #{tpu_custom_call.1} parent=0
    #allocation3 [shape = 'u8[1024]{0}', space=vmem, size = 0x400, scoped, tag = 'output window, operand 0']
    #allocation4 [shape = 's32[2]{0}', space=sflag, size = 0x8, scoped, tag = 'scoped memory for tpu_custom_call.1']
    %17 = vsyncpa [#allocation4], 0
    %s18 = scalar_lea.sflag [#allocation4], 1
    %19 = vsyncpa %s18, 0
    loop: start=0, step=1, limit=4
    $region2: #{tpu_custom_call.1} parent=1 // loop_pre_header
      _
    $region3: #{tpu_custom_call.1} parent=1 // loop_header
      %s21 = sphi 0, %s25
      %p22 = scmp.ge.s32.totalorder %s21, 4
      %s31 = sphi 0, %s33
      %s34 = sphi 0, %s31
      %s35 = sphi 0, %s34
      %s51 = sphi 0, %s35
      %s57 = sphi 0, %s59
      %s60 = sphi 0, %s57
      %s61 = sphi 0, %s60
      %s77 = sphi 0, %s61
      %s81 = sphi 0, %s81
      %s83 = sphi 0, %s81
      %s84 = sphi 0, %s83
      %s98 = sphi 0, %s84
      %s102 = sphi 0, %s102
      %s104 = sphi 0, %s102
      %s105 = sphi 0, %s104
      %s119 = sphi 0, %s105
      %s123 = sphi 0, %s123
      %s125 = sphi 0, %s123
      %s126 = sphi 0, %s125
      %s140 = sphi 0, %s126
      %s144 = sphi 0, %s144
      %s146 = sphi 0, %s144
      %s147 = sphi 0, %s146
      %s161 = sphi 0, %s147
      %s165 = sphi 0, %s165
      %s167 = sphi 0, %s165
      %s168 = sphi 0, %s167
      %s182 = sphi 0, %s168
      %s186 = sphi 0, %s186
      %s188 = sphi 0, %s186
      %s189 = sphi 0, %s188
      %s203 = sphi 0, %s189
      %s207 = sphi 0, %s207
      %s209 = sphi 0, %s207
      %s210 = sphi 0, %s209
      %s224 = sphi 0, %s210
      %s228 = sphi 0, %s228
      %s230 = sphi 0, %s228
      %s231 = sphi 0, %s230
      %s245 = sphi 0, %s231
      %s251 = sphi 0, %s253
      %s254 = sphi 0, %s251
      %s255 = sphi 0, %s254
      %s271 = sphi 0, %s255
    $region4: #{tpu_custom_call.1} parent=1 // loop_header_branch
      %24 = sbr.rel (%p22) target = $region8
    $region5: #{tpu_custom_call.1} parent=1 // loop_body
      %s26 = ssub.s32 %s21, 1
      %s27 = ssub.s32 %s21, 2
      %s28 = sadd.s32 %s21, 1
      %s29 = ssub.s32 %s21, %s28
      %p30 = scmp.eq.s32.totalorder %s29, 0
      %s32 = sadd.s32 %s31, 1
      %s33 = scalar_select %p30, %s31, %s32
      %p36 = pneg %p30
      %p37 = scmp.eq.s32.totalorder %s21, 1
      %p38 = por %p36, %p37
      %p39 = scmp.ne.s32.totalorder %s31, %s34
      %p40 = scmp.eq.s32.totalorder %s21, 0
      %p41 = por %p39, %p40
      %p42 = scmp.ne.s32.totalorder %s31, %s34
      %p43 = scmp.eq.s32.totalorder %s26, 1
      %p44 = por %p42, %p43
      %p45 = scmp.ne.s32.totalorder %s34, %s35
      %p46 = scmp.eq.s32.totalorder %s26, 0
      %p47 = por %p45, %p46
      %p48 = scmp.ne.s32.totalorder %s34, %s35
      %p49 = scmp.eq.s32.totalorder %s27, 1
      %p50 = por %p48, %p49
      %p52 = scmp.ne.s32.totalorder %s35, %s51
      %p53 = scmp.eq.s32.totalorder %s27, 0
      %p54 = por %p52, %p53
      %s55 = ssub.s32 %s21, %s28
      %p56 = scmp.eq.s32.totalorder %s55, 0
      %s58 = sadd.s32 %s57, 1
      %s59 = scalar_select %p56, %s57, %s58
      %p62 = pneg %p56
      %p63 = scmp.eq.s32.totalorder %s21, 1
      %p64 = por %p62, %p63
      %p65 = scmp.ne.s32.totalorder %s57, %s60
      %p66 = scmp.eq.s32.totalorder %s21, 0
      %p67 = por %p65, %p66
      %p68 = scmp.ne.s32.totalorder %s57, %s60
      %p69 = scmp.eq.s32.totalorder %s26, 1
      %p70 = por %p68, %p69
      %p71 = scmp.ne.s32.totalorder %s60, %s61
      %p72 = scmp.eq.s32.totalorder %s26, 0
      %p73 = por %p71, %p72
      %p74 = scmp.ne.s32.totalorder %s60, %s61
      %p75 = scmp.eq.s32.totalorder %s27, 1
      %p76 = por %p74, %p75
      %p78 = scmp.ne.s32.totalorder %s61, %s77
      %p79 = scmp.eq.s32.totalorder %s27, 0
      %p80 = por %p78, %p79
      %s82 = sadd.s32 %s81, 1
      %p85 = scmp.eq.s32.totalorder %s21, 1
      %p86 = scmp.ne.s32.totalorder %s81, %s83
      %p87 = scmp.eq.s32.totalorder %s21, 0
      %p88 = por %p86, %p87
      %p89 = scmp.ne.s32.totalorder %s81, %s83
      %p90 = scmp.eq.s32.totalorder %s26, 1
      %p91 = por %p89, %p90
      %p92 = scmp.ne.s32.totalorder %s83, %s84
      %p93 = scmp.eq.s32.totalorder %s26, 0
      %p94 = por %p92, %p93
      %p95 = scmp.ne.s32.totalorder %s83, %s84
      %p96 = scmp.eq.s32.totalorder %s27, 1
      %p97 = por %p95, %p96
      %p99 = scmp.ne.s32.totalorder %s84, %s98
      %p100 = scmp.eq.s32.totalorder %s27, 0
      %p101 = por %p99, %p100
      %s103 = sadd.s32 %s102, 1
      %p106 = scmp.eq.s32.totalorder %s21, 1
      %p107 = scmp.ne.s32.totalorder %s102, %s104
      %p108 = scmp.eq.s32.totalorder %s21, 0
      %p109 = por %p107, %p108
      %p110 = scmp.ne.s32.totalorder %s102, %s104
      %p111 = scmp.eq.s32.totalorder %s26, 1
      %p112 = por %p110, %p111
      %p113 = scmp.ne.s32.totalorder %s104, %s105
      %p114 = scmp.eq.s32.totalorder %s26, 0
      %p115 = por %p113, %p114
      %p116 = scmp.ne.s32.totalorder %s104, %s105
      %p117 = scmp.eq.s32.totalorder %s27, 1
      %p118 = por %p116, %p117
      %p120 = scmp.ne.s32.totalorder %s105, %s119
      %p121 = scmp.eq.s32.totalorder %s27, 0
      %p122 = por %p120, %p121
      %s124 = sadd.s32 %s123, 1
      %p127 = scmp.eq.s32.totalorder %s21, 1
      %p128 = scmp.ne.s32.totalorder %s123, %s125
      %p129 = scmp.eq.s32.totalorder %s21, 0
      %p130 = por %p128, %p129
      %p131 = scmp.ne.s32.totalorder %s123, %s125
      %p132 = scmp.eq.s32.totalorder %s26, 1
      %p133 = por %p131, %p132
      %p134 = scmp.ne.s32.totalorder %s125, %s126
      %p135 = scmp.eq.s32.totalorder %s26, 0
      %p136 = por %p134, %p135
      %p137 = scmp.ne.s32.totalorder %s125, %s126
      %p138 = scmp.eq.s32.totalorder %s27, 1
      %p139 = por %p137, %p138
      %p141 = scmp.ne.s32.totalorder %s126, %s140
      %p142 = scmp.eq.s32.totalorder %s27, 0
      %p143 = por %p141, %p142
      %s145 = sadd.s32 %s144, 1
      %p148 = scmp.eq.s32.totalorder %s21, 1
      %p149 = scmp.ne.s32.totalorder %s144, %s146
      %p150 = scmp.eq.s32.totalorder %s21, 0
      %p151 = por %p149, %p150
      %p152 = scmp.ne.s32.totalorder %s144, %s146
      %p153 = scmp.eq.s32.totalorder %s26, 1
      %p154 = por %p152, %p153
      %p155 = scmp.ne.s32.totalorder %s146, %s147
      %p156 = scmp.eq.s32.totalorder %s26, 0
      %p157 = por %p155, %p156
      %p158 = scmp.ne.s32.totalorder %s146, %s147
      %p159 = scmp.eq.s32.totalorder %s27, 1
      %p160 = por %p158, %p159
      %p162 = scmp.ne.s32.totalorder %s147, %s161
      %p163 = scmp.eq.s32.totalorder %s27, 0
      %p164 = por %p162, %p163
      %s166 = sadd.s32 %s165, 1
      %p169 = scmp.eq.s32.totalorder %s21, 1
      %p170 = scmp.ne.s32.totalorder %s165, %s167
      %p171 = scmp.eq.s32.totalorder %s21, 0
      %p172 = por %p170, %p171
      %p173 = scmp.ne.s32.totalorder %s165, %s167
      %p174 = scmp.eq.s32.totalorder %s26, 1
      %p175 = por %p173, %p174
      %p176 = scmp.ne.s32.totalorder %s167, %s168
      %p177 = scmp.eq.s32.totalorder %s26, 0
      %p178 = por %p176, %p177
      %p179 = scmp.ne.s32.totalorder %s167, %s168
      %p180 = scmp.eq.s32.totalorder %s27, 1
      %p181 = por %p179, %p180
      %p183 = scmp.ne.s32.totalorder %s168, %s182
      %p184 = scmp.eq.s32.totalorder %s27, 0
      %p185 = por %p183, %p184
      %s187 = sadd.s32 %s186, 1
      %p190 = scmp.eq.s32.totalorder %s21, 1
      %p191 = scmp.ne.s32.totalorder %s186, %s188
      %p192 = scmp.eq.s32.totalorder %s21, 0
      %p193 = por %p191, %p192
      %p194 = scmp.ne.s32.totalorder %s186, %s188
      %p195 = scmp.eq.s32.totalorder %s26, 1
      %p196 = por %p194, %p195
      %p197 = scmp.ne.s32.totalorder %s188, %s189
      %p198 = scmp.eq.s32.totalorder %s26, 0
      %p199 = por %p197, %p198
      %p200 = scmp.ne.s32.totalorder %s188, %s189
      %p201 = scmp.eq.s32.totalorder %s27, 1
      %p202 = por %p200, %p201
      %p204 = scmp.ne.s32.totalorder %s189, %s203
      %p205 = scmp.eq.s32.totalorder %s27, 0
      %p206 = por %p204, %p205
      %s208 = sadd.s32 %s207, 1
      %p211 = scmp.eq.s32.totalorder %s21, 1
      %p212 = scmp.ne.s32.totalorder %s207, %s209
      %p213 = scmp.eq.s32.totalorder %s21, 0
      %p214 = por %p212, %p213
      %p215 = scmp.ne.s32.totalorder %s207, %s209
      %p216 = scmp.eq.s32.totalorder %s26, 1
      %p217 = por %p215, %p216
      %p218 = scmp.ne.s32.totalorder %s209, %s210
      %p219 = scmp.eq.s32.totalorder %s26, 0
      %p220 = por %p218, %p219
      %p221 = scmp.ne.s32.totalorder %s209, %s210
      %p222 = scmp.eq.s32.totalorder %s27, 1
      %p223 = por %p221, %p222
      %p225 = scmp.ne.s32.totalorder %s210, %s224
      %p226 = scmp.eq.s32.totalorder %s27, 0
      %p227 = por %p225, %p226
      %s229 = sadd.s32 %s228, 1
      %p232 = scmp.eq.s32.totalorder %s21, 1
      %p233 = scmp.ne.s32.totalorder %s228, %s230
      %p234 = scmp.eq.s32.totalorder %s21, 0
      %p235 = por %p233, %p234
      %p236 = scmp.ne.s32.totalorder %s228, %s230
      %p237 = scmp.eq.s32.totalorder %s26, 1
      %p238 = por %p236, %p237
      %p239 = scmp.ne.s32.totalorder %s230, %s231
      %p240 = scmp.eq.s32.totalorder %s26, 0
      %p241 = por %p239, %p240
      %p242 = scmp.ne.s32.totalorder %s230, %s231
      %p243 = scmp.eq.s32.totalorder %s27, 1
      %p244 = por %p242, %p243
      %p246 = scmp.ne.s32.totalorder %s231, %s245
      %p247 = scmp.eq.s32.totalorder %s27, 0
      %p248 = por %p246, %p247
      %s249 = ssub.s32 %s21, %s28
      %p250 = scmp.eq.s32.totalorder %s249, 0
      %s252 = sadd.s32 %s251, 1
      %s253 = scalar_select %p250, %s251, %s252
      %p256 = pneg %p250
      %p257 = scmp.eq.s32.totalorder %s21, 1
      %p258 = por %p256, %p257
      %p259 = scmp.ne.s32.totalorder %s251, %s254
      %p260 = scmp.eq.s32.totalorder %s21, 0
      %p261 = por %p259, %p260
      %p262 = scmp.ne.s32.totalorder %s251, %s254
      %p263 = scmp.eq.s32.totalorder %s26, 1
      %p264 = por %p262, %p263
      %p265 = scmp.ne.s32.totalorder %s254, %s255
      %p266 = scmp.eq.s32.totalorder %s26, 0
      %p267 = por %p265, %p266
      %p268 = scmp.ne.s32.totalorder %s254, %s255
      %p269 = scmp.eq.s32.totalorder %s27, 1
      %p270 = por %p268, %p269
      %p272 = scmp.ne.s32.totalorder %s255, %s271
      %p273 = scmp.eq.s32.totalorder %s27, 0
      %p274 = por %p272, %p273
      %p275 = scmp.le.s32.totalorder 1, %s21
      %p276 = scmp.lt.s32.totalorder %s21, 3
      %p277 = pnand %p275, %p276
      %p278 = pneg %p277
      // Predicated region
      $region9: #{tpu_custom_call.1} parent=5 // pred_check
        _
      $region10: #{tpu_custom_call.1} parent=5 // pred_check_branch
        %280 = sbr.rel (%p277) target = $region12
      $region11: #{tpu_custom_call.1} parent=5 // pred_region
        %s281 = ssub.s32 %s21, 1
        // Predicated region
        $region13: #{tpu_custom_call.1} parent=11 // pred_check
          %p282 = pneg %p94
        $region14: #{tpu_custom_call.1} parent=11 // pred_check_branch
          %284 = sbr.rel (%p282) target = $region16
        $region15: #{tpu_custom_call.1} parent=11 // pred_region
          _
        $region16: #{tpu_custom_call.1} parent=11 // pred_fallthru
          _
        // Predicated region
        $region17: #{tpu_custom_call.1} parent=11 // pred_check
          %p285 = pneg %p115
        $region18: #{tpu_custom_call.1} parent=11 // pred_check_branch
          %287 = sbr.rel (%p285) target = $region20
        $region19: #{tpu_custom_call.1} parent=11 // pred_region
          _
        $region20: #{tpu_custom_call.1} parent=11 // pred_fallthru
          _
        // Predicated region
        $region21: #{tpu_custom_call.1} parent=11 // pred_check
          %p288 = pneg %p136
        $region22: #{tpu_custom_call.1} parent=11 // pred_check_branch
          %290 = sbr.rel (%p288) target = $region24
        $region23: #{tpu_custom_call.1} parent=11 // pred_region
          _
        $region24: #{tpu_custom_call.1} parent=11 // pred_fallthru
          _
        // Predicated region
        $region25: #{tpu_custom_call.1} parent=11 // pred_check
          %p291 = pneg %p157
        $region26: #{tpu_custom_call.1} parent=11 // pred_check_branch
          %293 = sbr.rel (%p291) target = $region28
        $region27: #{tpu_custom_call.1} parent=11 // pred_region
          _
        $region28: #{tpu_custom_call.1} parent=11 // pred_fallthru
          _
        // Predicated region
        $region29: #{tpu_custom_call.1} parent=11 // pred_check
          %p294 = pneg %p178
        $region30: #{tpu_custom_call.1} parent=11 // pred_check_branch
          %296 = sbr.rel (%p294) target = $region32
        $region31: #{tpu_custom_call.1} parent=11 // pred_region
          _
        $region32: #{tpu_custom_call.1} parent=11 // pred_fallthru
          _
        // Predicated region
        $region33: #{tpu_custom_call.1} parent=11 // pred_check
          %p297 = pneg %p199
        $region34: #{tpu_custom_call.1} parent=11 // pred_check_branch
          %299 = sbr.rel (%p297) target = $region36
        $region35: #{tpu_custom_call.1} parent=11 // pred_region
          _
        $region36: #{tpu_custom_call.1} parent=11 // pred_fallthru
          _
        // Predicated region
        $region37: #{tpu_custom_call.1} parent=11 // pred_check
          %p300 = pneg %p220
        $region38: #{tpu_custom_call.1} parent=11 // pred_check_branch
          %302 = sbr.rel (%p300) target = $region40
        $region39: #{tpu_custom_call.1} parent=11 // pred_region
          _
        $region40: #{tpu_custom_call.1} parent=11 // pred_fallthru
          _
        // Predicated region
        $region41: #{tpu_custom_call.1} parent=11 // pred_check
          %p303 = pneg %p241
        $region42: #{tpu_custom_call.1} parent=11 // pred_check_branch
          %305 = sbr.rel (%p303) target = $region44
        $region43: #{tpu_custom_call.1} parent=11 // pred_region
          _
        $region44: #{tpu_custom_call.1} parent=11 // pred_fallthru
          _
      $region12: #{tpu_custom_call.1} parent=5 // pred_fallthru
        _
      %p306 = scmp.lt.s32.totalorder %s21, 2
      // Predicated region
      $region45: #{tpu_custom_call.1} parent=5 // pred_check
        %p307 = pneg %p306
      $region46: #{tpu_custom_call.1} parent=5 // pred_check_branch
        %309 = sbr.rel (%p307) target = $region48
      $region47: #{tpu_custom_call.1} parent=5 // pred_region
        // Predicated region
        $region49: #{tpu_custom_call.1} parent=47 // pred_check
          %p310 = pneg %p41
        $region50: #{tpu_custom_call.1} parent=47 // pred_check_branch
          %312 = sbr.rel (%p310) target = $region52
        $region51: #{tpu_custom_call.1} parent=47 // pred_region
          %p313 = scmp.lt.s32.totalorder %s21, 1
          %s314 = scalar_select %p313, %s21, 1
          %s315 = smul.addr %s314, 2
          %s316 = scalar_lea.vmem %s0, %s315
        $region52: #{tpu_custom_call.1} parent=47 // pred_fallthru
          _
        // Predicated region
        $region53: #{tpu_custom_call.1} parent=47 // pred_check
          %p317 = pneg %p67
        $region54: #{tpu_custom_call.1} parent=47 // pred_check_branch
          %319 = sbr.rel (%p317) target = $region56
        $region55: #{tpu_custom_call.1} parent=47 // pred_region
          %p320 = scmp.lt.s32.totalorder %s21, 1
          %s321 = scalar_select %p320, %s21, 1
          %s322 = smul.addr %s321, 4
          %s323 = scalar_lea.vmem %s1, %s322
        $region56: #{tpu_custom_call.1} parent=47 // pred_fallthru
          _
      $region48: #{tpu_custom_call.1} parent=5 // pred_fallthru
        _
      %p324 = scmp.le.s32.totalorder 1, %s21
      %p325 = scmp.lt.s32.totalorder %s21, 3
      %p326 = pnand %p324, %p325
      %p327 = pneg %p326
      // Predicated region
      $region57: #{tpu_custom_call.1} parent=5 // pred_check
        _
      $region58: #{tpu_custom_call.1} parent=5 // pred_check_branch
        %329 = sbr.rel (%p326) target = $region60
      $region59: #{tpu_custom_call.1} parent=5 // pred_region
        %s330 = ssub.s32 %s21, 1
        %p331 = scmp.lt.s32.totalorder %s26, 1
        %s332 = scalar_select %p331, %s26, 1
        %s333 = smul.addr %s332, 2
        %s334 = scalar_lea.vmem %s0, %s333
        %p335 = pneg %p47
        %p336 = pneg %p44
        %p337 = scmp.lt.s32.totalorder %s26, 1
        %s338 = scalar_select %p337, %s26, 1
        %s339 = smul.addr %s338, 4
        %s340 = scalar_lea.vmem %s1, %s339
        %p341 = pneg %p73
        %p342 = pneg %p70
        %p343 = pneg %p94
        %p344 = pneg %p91
        %p345 = pneg %p115
        %p346 = pneg %p112
        %p347 = pneg %p136
        %p348 = pneg %p133
        %p349 = pneg %p157
        %p350 = pneg %p154
        %p351 = pneg %p178
        %p352 = pneg %p175
        %p353 = pneg %p199
        %p354 = pneg %p196
        %p355 = pneg %p220
        %p356 = pneg %p217
        %p357 = pneg %p241
        %p358 = pneg %p238
        %p359 = pneg %p267
        %p360 = pneg %p264
        %s361 = sand.u32 %s254, 1
        %s362 = scalar_lea.sflag [#allocation4], %s361
        %s363 = sand.u32 %s254, 1
        %s364 = scalar_lea.vmem [#allocation3], %s363
        %p365 = scmp.lt.s32.totalorder %s26, 1
        %s366 = scalar_select %p365, %s26, 1
        %s367 = smul.addr %s366, 2
        %s368 = scalar_lea.vmem %s0, %s367
        %p369 = scmp.lt.s32.totalorder %s26, 1
        %s370 = scalar_select %p369, %s26, 1
        %s371 = smul.addr %s370, 4
        %s372 = scalar_lea.vmem %s1, %s371
        %v374 = vld [vmem:[%s368] sm:$0x3]
        %v375 = vunpack.c.0.s8 %v374
        %v376 = vcvt.s32.f32 %v375
        %v377 = vpack.c.bf16 %v376, %v376
        %v378 = vld [vmem:[%s3] sm:$0xf]
        %v379 = vld [vmem:[%s3 + $0x4] sm:$0xf]
        %v380 = vld [vmem:[%s3 + $0x8] sm:$0xf]
        %v381 = vld [vmem:[%s3 + $0xc] sm:$0xf]
        %v382 = vld [vmem:[%s3 + $0x10] sm:$0xf]
        %v383 = vld [vmem:[%s3 + $0x14] sm:$0xf]
        %v390 = vunpack.c.l.b16 %v378
        %v391 = vunpack.c.l.b16 %v379
        %v392 = vunpack.c.l.b16 %v380
        %v393 = vunpack.c.l.b16 %v381
        %v394 = vunpack.c.l.b16 %v382
        %v395 = vunpack.c.l.b16 %v383
        %v396 = vpack.c.b16 %v391, %v390
        %v397 = vpack.c.b16 %v393, %v392
        %v398 = vpack.c.b16 %v395, %v394
        %vm399 = vcmask 64512
        %v401 = vsel %vm399, %v396, 0
        %v404 = vsel %vm399, %v397, 0
        %v407 = vsel %vm399, %v398, 0
        %vm409 = vcmask 1043456
        %v411 = vsel %vm409, %v377, 0
        %413 = vmatpush.bf16.msra.mxu0 0
        %414 = vmatpush.bf16.msra.mxu0 0
        %415 = vmatpush.bf16.msra.mxu0 0
        %416 = vmatpush.bf16.msra.mxu0 0
        %417 = vmatpush.bf16.msra.mxu0 0
        %418 = vmatpush.bf16.msra.mxu0 0
        %419 = vmatpush.bf16.msra.mxu0 0
        %420 = vmatpush.bf16.msra.mxu0 %v411
        %421 = vmatmul.bf16.gmra.mxu0 %v401
        %v422 = vpop.f32.mrf.mxu0
        %v423 = vadd.f32 0.0, %v422
        %v424 = vpop.f32.mrf.mxu0
        %v425 = vadd.f32 0.0, %v424
        %426 = vmatmul.bf16.gmra.mxu0 %v404
        %v427 = vpop.f32.mrf.mxu0
        %v428 = vadd.f32 0.0, %v427
        %v429 = vpop.f32.mrf.mxu0
        %v430 = vadd.f32 0.0, %v429
        %431 = vmatmul.bf16.gmra.mxu0 %v407
        %v432 = vpop.f32.mrf.mxu0
        %v433 = vadd.f32 0.0, %v432
        %v434 = vpop.f32.mrf.mxu0
        %v435 = vadd.f32 0.0, %v434
        %436 = vdwg.mxu0
        %v437 = vld [vmem:[%s2] sm:$0xff]
        %v438 = vld [vmem:[%s2 + $0x8] sm:$0xff]
        %v439 = vld [vmem:[%s2 + $0x10] sm:$0xff]
        %v440 = vld [vmem:[%s2 + $0x18] sm:$0xff]
        %v441 = vld [vmem:[%s2 + $0x20] sm:$0xff]
        %v442 = vld [vmem:[%s2 + $0x28] sm:$0xff]
        %444 = vset.pattern.permute.xlu0 0
        %445 = vperm.xlu0 %444, %v437
        %v446 = vpop.permute.xlu0 %445
        %449 = vset.pattern.permute.xlu0 0
        %450 = vperm.xlu0 %449, %v438
        %v451 = vpop.permute.xlu0 %450
        %454 = vset.pattern.permute.xlu0 0
        %455 = vperm.xlu0 %454, %v439
        %v456 = vpop.permute.xlu0 %455
        %459 = vset.pattern.permute.xlu0 0
        %460 = vperm.xlu0 %459, %v440
        %v461 = vpop.permute.xlu0 %460
        %464 = vset.pattern.permute.xlu0 0
        %465 = vperm.xlu0 %464, %v441
        %v466 = vpop.permute.xlu0 %465
        %469 = vset.pattern.permute.xlu0 0
        %470 = vperm.xlu0 %469, %v442
        %v471 = vpop.permute.xlu0 %470
        %vm473 = vcmp.eq.f32.partialorder %v446, %v423
        %vm474 = vcmp.eq.f32.partialorder %v451, %v425
        %vm475 = vcmp.eq.f32.partialorder %v456, %v428
        %vm476 = vcmp.eq.f32.partialorder %v461, %v430
        %vm477 = vcmp.eq.f32.partialorder %v466, %v433
        %vm478 = vcmp.eq.f32.partialorder %v471, %v435
        %v479 = vsel %vm473, 1, 0
        %v480 = vsel %vm474, 1, 0
        %v481 = vsel %vm475, 1, 0
        %v482 = vsel %vm476, 1, 0
        %v483 = vsel %vm477, 1, 0
        %v484 = vsel %vm478, 1, 0
        %v485 = vcvt.s32.f32 %v479
        %v486 = vcvt.s32.f32 %v480
        %v487 = vcvt.s32.f32 %v481
        %v488 = vcvt.s32.f32 %v482
        %v489 = vcvt.s32.f32 %v483
        %v490 = vcvt.s32.f32 %v484
        %v491 = vld [vmem:[%s4] sm:$0xf]
        %v492 = vld [vmem:[%s4 + $0x4] sm:$0xf]
        %v493 = vld [vmem:[%s4 + $0x8] sm:$0xf]
        %v494 = vld [vmem:[%s4 + $0xc] sm:$0xf]
        %v495 = vld [vmem:[%s4 + $0x10] sm:$0xf]
        %v496 = vld [vmem:[%s4 + $0x14] sm:$0xf]
        %v497 = vld [vmem:[%s372] sm:$0x7]
        %v504 = vunpack.c.l.b16 %v491
        %v505 = vunpack.c.l.b16 %v492
        %v506 = vunpack.c.l.b16 %v493
        %v507 = vunpack.c.l.b16 %v494
        %v508 = vunpack.c.l.b16 %v495
        %v509 = vunpack.c.l.b16 %v496
        %v510 = vpack.c.b16 %v505, %v504
        %v511 = vpack.c.b16 %v507, %v506
        %v512 = vpack.c.b16 %v509, %v508
        %vm513 = vcmask 39936
        %v515 = vsel %vm513, %v510, 0
        %v518 = vsel %vm513, %v511, 0
        %v521 = vsel %vm513, %v512, 0
        %vm523 = vcmask 1041408
        %vm524 = vcmask 1042432
        %v525 = vsel %vm523, 4294967295, 65535
        %v526 = vsel %vm524, %v525, 0
        %v528 = vand.u32 %v497, %v526
        %530 = vmatpush.bf16.msra.mxu0 0
        %531 = vmatpush.bf16.msra.mxu0 0
        %532 = vmatpush.bf16.msra.mxu0 0
        %533 = vmatpush.bf16.msra.mxu0 0
        %534 = vmatpush.bf16.msra.mxu0 0
        %535 = vmatpush.bf16.msra.mxu0 0
        %536 = vmatpush.bf16.msra.mxu0 0
        %537 = vmatpush.bf16.msra.mxu0 %v528
        %538 = vmatmul.bf16.gmra.mxu0 %v515
        %v539 = vpop.f32.mrf.mxu0
        %v540 = vadd.f32 0.0, %v539
        %v541 = vpop.f32.mrf.mxu0
        %v542 = vadd.f32 0.0, %v541
        %543 = vmatmul.bf16.gmra.mxu0 %v518
        %v544 = vpop.f32.mrf.mxu0
        %v545 = vadd.f32 0.0, %v544
        %v546 = vpop.f32.mrf.mxu0
        %v547 = vadd.f32 0.0, %v546
        %548 = vmatmul.bf16.gmra.mxu0 %v521
        %v549 = vpop.f32.mrf.mxu0
        %v550 = vadd.f32 0.0, %v549
        %v551 = vpop.f32.mrf.mxu0
        %v552 = vadd.f32 0.0, %v551
        %553 = vdwg.mxu0
        %v554 = vadd.f32 %v485, %v540
        %v555 = vadd.f32 %v486, %v542
        %v556 = vadd.f32 %v487, %v545
        %v557 = vadd.f32 %v488, %v547
        %v558 = vadd.f32 %v489, %v550
        %v559 = vadd.f32 %v490, %v552
        %v560 = vpack.c.bf16 %v555, %v554
        %v561 = vpack.c.bf16 %v557, %v556
        %v562 = vpack.c.bf16 %v559, %v558
        %v563 = vld [vmem:[%s5] sm:$0xf]
        %v564 = vld [vmem:[%s5 + $0x4] sm:$0xf]
        %v565 = vld [vmem:[%s5 + $0x8] sm:$0xf]
        %v566 = vld [vmem:[%s5 + $0xc] sm:$0xf]
        %v567 = vld [vmem:[%s5 + $0x10] sm:$0xf]
        %v568 = vld [vmem:[%s5 + $0x14] sm:$0xf]
        %v569 = vld [vmem:[%s5 + $0x18] sm:$0xf]
        %v570 = vld [vmem:[%s5 + $0x1c] sm:$0xf]
        %v571 = vld [vmem:[%s5 + $0x20] sm:$0xf]
        %v572 = vld [vmem:[%s5 + $0x24] sm:$0xf]
        %v573 = vld [vmem:[%s5 + $0x28] sm:$0xf]
        %v574 = vld [vmem:[%s5 + $0x2c] sm:$0xf]
        %v575 = vld [vmem:[%s5 + $0x30] sm:$0xf]
        %v576 = vld [vmem:[%s5 + $0x34] sm:$0xf]
        %v577 = vld [vmem:[%s5 + $0x38] sm:$0xf]
        %v578 = vld [vmem:[%s5 + $0x3c] sm:$0xf]
        %v595 = vunpack.c.l.b16 %v563
        %v596 = vunpack.c.l.b16 %v564
        %v597 = vunpack.c.l.b16 %v565
        %v598 = vunpack.c.l.b16 %v566
        %v599 = vunpack.c.l.b16 %v567
        %v600 = vunpack.c.l.b16 %v568
        %v601 = vunpack.c.l.b16 %v569
        %v602 = vunpack.c.l.b16 %v570
        %v603 = vunpack.c.l.b16 %v571
        %v604 = vunpack.c.l.b16 %v572
        %v605 = vunpack.c.l.b16 %v573
        %v606 = vunpack.c.l.b16 %v574
        %v607 = vunpack.c.l.b16 %v575
        %v608 = vunpack.c.l.b16 %v576
        %v609 = vunpack.c.l.b16 %v577
        %v610 = vunpack.c.l.b16 %v578
        %v611 = vpack.c.b16 %v596, %v595
        %v612 = vpack.c.b16 %v598, %v597
        %v613 = vpack.c.b16 %v600, %v599
        %v614 = vpack.c.b16 %v602, %v601
        %v615 = vpack.c.b16 %v604, %v603
        %v616 = vpack.c.b16 %v606, %v605
        %v617 = vpack.c.b16 %v608, %v607
        %v618 = vpack.c.b16 %v610, %v609
        %vm619 = vcmask 392192
        %v621 = vsel %vm619, %v611, 0
        %v624 = vsel %vm619, %v612, 0
        %v627 = vsel %vm619, %v613, 0
        %v630 = vsel %vm619, %v614, 0
        %v633 = vsel %vm619, %v615, 0
        %v636 = vsel %vm619, %v616, 0
        %v639 = vsel %vm619, %v617, 0
        %v642 = vsel %vm619, %v618, 0
        %644 = vmatpush.bf16.msra.mxu0 0
        %645 = vmatpush.bf16.msra.mxu0 0
        %646 = vmatpush.bf16.msra.mxu0 0
        %647 = vmatpush.bf16.msra.mxu0 0
        %648 = vmatpush.bf16.msra.mxu0 0
        %649 = vmatpush.bf16.msra.mxu0 %v562
        %650 = vmatpush.bf16.msra.mxu0 %v561
        %651 = vmatpush.bf16.msra.mxu0 %v560
        %652 = vmatmul.bf16.gmra.mxu0 %v621
        %v653 = vpop.f32.mrf.mxu0
        %v654 = vadd.f32 0.0, %v653
        %v655 = vpop.f32.mrf.mxu0
        %v656 = vadd.f32 0.0, %v655
        %657 = vmatmul.bf16.gmra.mxu0 %v624
        %v658 = vpop.f32.mrf.mxu0
        %v659 = vadd.f32 0.0, %v658
        %v660 = vpop.f32.mrf.mxu0
        %v661 = vadd.f32 0.0, %v660
        %662 = vmatmul.bf16.gmra.mxu0 %v627
        %v663 = vpop.f32.mrf.mxu0
        %v664 = vadd.f32 0.0, %v663
        %v665 = vpop.f32.mrf.mxu0
        %v666 = vadd.f32 0.0, %v665
        %667 = vmatmul.bf16.gmra.mxu0 %v630
        %v668 = vpop.f32.mrf.mxu0
        %v669 = vadd.f32 0.0, %v668
        %v670 = vpop.f32.mrf.mxu0
        %v671 = vadd.f32 0.0, %v670
        %672 = vmatmul.bf16.gmra.mxu0 %v633
        %v673 = vpop.f32.mrf.mxu0
        %v674 = vadd.f32 0.0, %v673
        %v675 = vpop.f32.mrf.mxu0
        %v676 = vadd.f32 0.0, %v675
        %677 = vmatmul.bf16.gmra.mxu0 %v636
        %v678 = vpop.f32.mrf.mxu0
        %v679 = vadd.f32 0.0, %v678
        %v680 = vpop.f32.mrf.mxu0
        %v681 = vadd.f32 0.0, %v680
        %682 = vmatmul.bf16.gmra.mxu0 %v639
        %v683 = vpop.f32.mrf.mxu0
        %v684 = vadd.f32 0.0, %v683
        %v685 = vpop.f32.mrf.mxu0
        %v686 = vadd.f32 0.0, %v685
        %687 = vmatmul.bf16.gmra.mxu0 %v642
        %v688 = vpop.f32.mrf.mxu0
        %v689 = vadd.f32 0.0, %v688
        %v690 = vpop.f32.mrf.mxu0
        %v691 = vadd.f32 0.0, %v690
        %692 = vdwg.mxu0
        %v693 = vmax.f32 %v654, 0.0
        %v694 = vmax.f32 %v656, 0.0
        %v695 = vmax.f32 %v659, 0.0
        %v696 = vmax.f32 %v661, 0.0
        %v697 = vmax.f32 %v664, 0.0
        %v698 = vmax.f32 %v666, 0.0
        %v699 = vmax.f32 %v669, 0.0
        %v700 = vmax.f32 %v671, 0.0
        %v701 = vmax.f32 %v674, 0.0
        %v702 = vmax.f32 %v676, 0.0
        %v703 = vmax.f32 %v679, 0.0
        %v704 = vmax.f32 %v681, 0.0
        %v705 = vmax.f32 %v684, 0.0
        %v706 = vmax.f32 %v686, 0.0
        %v707 = vmax.f32 %v689, 0.0
        %v708 = vmax.f32 %v691, 0.0
        %v709 = vpack.c.bf16 %v694, %v693
        %v710 = vpack.c.bf16 %v696, %v695
        %v711 = vpack.c.bf16 %v698, %v697
        %v712 = vpack.c.bf16 %v700, %v699
        %v713 = vpack.c.bf16 %v702, %v701
        %v714 = vpack.c.bf16 %v704, %v703
        %v715 = vpack.c.bf16 %v706, %v705
        %v716 = vpack.c.bf16 %v708, %v707
        %v717 = vld [vmem:[%s6] sm:$0xf]
        %v718 = vld [vmem:[%s6 + $0x4] sm:$0xf]
        %v719 = vld [vmem:[%s6 + $0x8] sm:$0xf]
        %v720 = vld [vmem:[%s6 + $0xc] sm:$0xf]
        %v721 = vld [vmem:[%s6 + $0x10] sm:$0xf]
        %v722 = vld [vmem:[%s6 + $0x14] sm:$0xf]
        %v723 = vld [vmem:[%s6 + $0x18] sm:$0xf]
        %v724 = vld [vmem:[%s6 + $0x1c] sm:$0xf]
        %v725 = vld [vmem:[%s7] sm:$0xff]
        %v726 = vld [vmem:[%s7 + $0x8] sm:$0xff]
        %v727 = vld [vmem:[%s7 + $0x10] sm:$0xff]
        %v728 = vld [vmem:[%s7 + $0x18] sm:$0xff]
        %v729 = vld [vmem:[%s7 + $0x20] sm:$0xff]
        %v730 = vld [vmem:[%s7 + $0x28] sm:$0xff]
        %v731 = vld [vmem:[%s7 + $0x30] sm:$0xff]
        %v732 = vld [vmem:[%s7 + $0x38] sm:$0xff]
        %734 = vset.pattern.permute.xlu0 0
        %735 = vperm.xlu0 %734, %v725
        %v736 = vpop.permute.xlu0 %735
        %739 = vset.pattern.permute.xlu0 0
        %740 = vperm.xlu0 %739, %v726
        %v741 = vpop.permute.xlu0 %740
        %744 = vset.pattern.permute.xlu0 0
        %745 = vperm.xlu0 %744, %v727
        %v746 = vpop.permute.xlu0 %745
        %749 = vset.pattern.permute.xlu0 0
        %750 = vperm.xlu0 %749, %v728
        %v751 = vpop.permute.xlu0 %750
        %754 = vset.pattern.permute.xlu0 0
        %755 = vperm.xlu0 %754, %v729
        %v756 = vpop.permute.xlu0 %755
        %759 = vset.pattern.permute.xlu0 0
        %760 = vperm.xlu0 %759, %v730
        %v761 = vpop.permute.xlu0 %760
        %764 = vset.pattern.permute.xlu0 0
        %765 = vperm.xlu0 %764, %v731
        %v766 = vpop.permute.xlu0 %765
        %769 = vset.pattern.permute.xlu0 0
        %770 = vperm.xlu0 %769, %v732
        %v771 = vpop.permute.xlu0 %770
        %v781 = vunpack.c.l.b16 %v717
        %v782 = vunpack.c.l.b16 %v718
        %v783 = vunpack.c.l.b16 %v719
        %v784 = vunpack.c.l.b16 %v720
        %v785 = vunpack.c.l.b16 %v721
        %v786 = vunpack.c.l.b16 %v722
        %v787 = vunpack.c.l.b16 %v723
        %v788 = vunpack.c.l.b16 %v724
        %v789 = vpack.c.b16 %v782, %v781
        %v790 = vpack.c.b16 %v784, %v783
        %v791 = vpack.c.b16 %v786, %v785
        %v792 = vpack.c.b16 %v788, %v787
        %797 = vmatpush.bf16.msra.mxu0 %v716
        %798 = vmatpush.bf16.msra.mxu0 %v715
        %799 = vmatpush.bf16.msra.mxu0 %v714
        %800 = vmatpush.bf16.msra.mxu0 %v713
        %801 = vmatpush.bf16.msra.mxu0 %v712
        %802 = vmatpush.bf16.msra.mxu0 %v711
        %803 = vmatpush.bf16.msra.mxu0 %v710
        %804 = vmatpush.bf16.msra.mxu0 %v709
        %805 = vmatmul.bf16.gmra.mxu0 %v789
        %v806 = vpop.f32.mrf.mxu0
        %v807 = vadd.f32 %v736, %v806
        %v808 = vpop.f32.mrf.mxu0
        %v809 = vadd.f32 %v741, %v808
        %810 = vmatmul.bf16.gmra.mxu0 %v790
        %v811 = vpop.f32.mrf.mxu0
        %v812 = vadd.f32 %v746, %v811
        %v813 = vpop.f32.mrf.mxu0
        %v814 = vadd.f32 %v751, %v813
        %815 = vmatmul.bf16.gmra.mxu0 %v791
        %v816 = vpop.f32.mrf.mxu0
        %v817 = vadd.f32 %v756, %v816
        %v818 = vpop.f32.mrf.mxu0
        %v819 = vadd.f32 %v761, %v818
        %820 = vmatmul.bf16.gmra.mxu0 %v792
        %v821 = vpop.f32.mrf.mxu0
        %v822 = vadd.f32 %v766, %v821
        %v823 = vpop.f32.mrf.mxu0
        %v824 = vadd.f32 %v771, %v823
        %825 = vdwg.mxu0
        %v826 = vmax.f32 %v807, 0.0
        %v827 = vmax.f32 %v809, 0.0
        %v828 = vmax.f32 %v812, 0.0
        %v829 = vmax.f32 %v814, 0.0
        %v830 = vmax.f32 %v817, 0.0
        %v831 = vmax.f32 %v819, 0.0
        %v832 = vmax.f32 %v822, 0.0
        %v833 = vmax.f32 %v824, 0.0
        %v834 = vld [vmem:[%s8] sm:$0xff]
        %v835 = vld [vmem:[%s8 + $0x8] sm:$0xff]
        %v836 = vld [vmem:[%s8 + $0x10] sm:$0xff]
        %v837 = vld [vmem:[%s8 + $0x18] sm:$0xff]
        %v838 = vld [vmem:[%s8 + $0x20] sm:$0xff]
        %v839 = vld [vmem:[%s8 + $0x28] sm:$0xff]
        %v840 = vld [vmem:[%s8 + $0x30] sm:$0xff]
        %v841 = vld [vmem:[%s8 + $0x38] sm:$0xff]
        %843 = vset.pattern.permute.xlu0 0
        %844 = vperm.xlu0 %843, %v834
        %v845 = vpop.permute.xlu0 %844
        %848 = vset.pattern.permute.xlu0 0
        %849 = vperm.xlu0 %848, %v835
        %v850 = vpop.permute.xlu0 %849
        %853 = vset.pattern.permute.xlu0 0
        %854 = vperm.xlu0 %853, %v836
        %v855 = vpop.permute.xlu0 %854
        %858 = vset.pattern.permute.xlu0 0
        %859 = vperm.xlu0 %858, %v837
        %v860 = vpop.permute.xlu0 %859
        %863 = vset.pattern.permute.xlu0 0
        %864 = vperm.xlu0 %863, %v838
        %v865 = vpop.permute.xlu0 %864
        %868 = vset.pattern.permute.xlu0 0
        %869 = vperm.xlu0 %868, %v839
        %v870 = vpop.permute.xlu0 %869
        %873 = vset.pattern.permute.xlu0 0
        %874 = vperm.xlu0 %873, %v840
        %v875 = vpop.permute.xlu0 %874
        %878 = vset.pattern.permute.xlu0 0
        %879 = vperm.xlu0 %878, %v841
        %v880 = vpop.permute.xlu0 %879
        %v882 = vmul.f32 %v826, %v845
        %v883 = vmul.f32 %v827, %v850
        %v884 = vmul.f32 %v828, %v855
        %v885 = vmul.f32 %v829, %v860
        %v886 = vmul.f32 %v830, %v865
        %v887 = vmul.f32 %v831, %v870
        %v888 = vmul.f32 %v832, %v875
        %v889 = vmul.f32 %v833, %v880
        %v890 = vadd.f32 %v882, %v883
        %v891 = vadd.f32 %v890, %v884
        %v892 = vadd.f32 %v891, %v885
        %v893 = vadd.f32 %v892, %v886
        %v894 = vadd.f32 %v893, %v887
        %v895 = vadd.f32 %v894, %v888
        %v896 = vadd.f32 %v895, %v889
        %v897 = vrot.slane %v896, 4
        %v898 = vadd.f32 %v896, %v897
        %v899 = vrot.slane %v898, 2
        %v900 = vadd.f32 %v898, %v899
        %v901 = vrot.slane %v900, 1
        %v902 = vadd.f32 %v900, %v901
        %v903 = vld [vmem:[#allocation2] sm:$0x1]
        %905 = vset.pattern.permute.xlu0 0
        %906 = vperm.xlu0 %905, %v903
        %v907 = vpop.permute.xlu0 %906
        %v909 = vperm.slane %v907, 0
        %v910 = vadd.f32 %v902, %v909
        %911 = vst [vmem:[%s364] sm:$0x1] %v910
        %s912 = sand.u32 %s254, 1
        %s913 = scalar_lea.sflag [#allocation4], %s912
        %s914 = sand.u32 %s254, 1
        %s915 = scalar_lea.vmem [#allocation3], %s914
        // Predicated region
        $region61: #{tpu_custom_call.1} parent=59 // pred_check
          %p916 = pneg %p264
        $region62: #{tpu_custom_call.1} parent=59 // pred_check_branch
          %918 = sbr.rel (%p916) target = $region64
        $region63: #{tpu_custom_call.1} parent=59 // pred_region
          %920 = vsyncadd %s913, 0
          %s921 = scalar_lea.hbm %s10, %s26
          %s923 = sshll.u32 %s915, 4
          %s924 = int_to_ptr.vmem [resolvable:$true] %s923
          %s925 = sshll.u32 %s921, 4
          %s926 = int_to_ptr.hbm [resolvable:$true] %s925
          %928 = dma.vmem_to_hbm [thread:$0]  %s924, 16, %s926, %s913
        $region64: #{tpu_custom_call.1} parent=59 // pred_fallthru
          _
      $region60: #{tpu_custom_call.1} parent=5 // pred_fallthru
        _
      %p929 = scmp.le.s32.totalorder 2, %s21
      // Predicated region
      $region65: #{tpu_custom_call.1} parent=5 // pred_check
        %p930 = pneg %p929
      $region66: #{tpu_custom_call.1} parent=5 // pred_check_branch
        %932 = sbr.rel (%p930) target = $region68
      $region67: #{tpu_custom_call.1} parent=5 // pred_region
        %s933 = ssub.s32 %s21, 2
        // Predicated region
        $region69: #{tpu_custom_call.1} parent=67 // pred_check
          %p934 = pneg %p270
        $region70: #{tpu_custom_call.1} parent=67 // pred_check_branch
          %936 = sbr.rel (%p934) target = $region72
        $region71: #{tpu_custom_call.1} parent=67 // pred_region
          %s937 = sand.u32 %s255, 1
          %s938 = scalar_lea.sflag [#allocation4], %s937
          %s939 = sand.u32 %s255, 1
          %s940 = scalar_lea.vmem [#allocation3], %s939
          %942 = dma.done %s938, 16
        $region72: #{tpu_custom_call.1} parent=67 // pred_fallthru
          _
      $region68: #{tpu_custom_call.1} parent=5 // pred_fallthru
        _
    $region6: #{tpu_custom_call.1} parent=1 // loop_footer
      %s25 = sadd.s32 1, %s21
    $region7: #{tpu_custom_call.1} parent=1 // loop_footer_branch
      %20 = sbr.rel target = $region3
    $region8: #{tpu_custom_call.1} parent=1 // loop_exit
      _
    %943 = vsyncpa [#allocation4], 1
    %s944 = scalar_lea.sflag [#allocation4], 1
    %945 = vsyncpa %s944, 1

</llo_original>
